<compile_context>
chip_gen: v7x
topology: tpu7x:2x2x1
jax: 0.10.0
libtpu: 0.0.40
codegen_flags: <defaults>
</compile_context>

<pallas_src>
import functools
import math

import jax
import jax.numpy as jnp
from jax.experimental import pallas as pl
from jax.experimental.pallas import tpu as pltpu


def _uop_concat_attention_kernel(attr_ref, repr_ref, wa_ref, wr_ref, b_ref,
                                 wv_ref, o_ref, *, matmul_dtype):
    # attr_ref : (TB, A)        wa_ref : (A, P)
    # repr_ref : (TB, S, D)     wr_ref : (D, P)
    # b_ref    : (1, P)         wv_ref : (1, P)
    # o_ref    : (TB, D)
    x = repr_ref[...]                           # (TB, S, D) f32
    tb, s, d = x.shape
    p = wa_ref.shape[1]

    if matmul_dtype is not None:
        attr_mm = attr_ref[...].astype(matmul_dtype)
        x_mm = x.astype(matmul_dtype)
        wa = wa_ref[...].astype(matmul_dtype)
        wr = wr_ref[...].astype(matmul_dtype)
    else:
        attr_mm, x_mm, wa, wr = attr_ref[...], x, wa_ref[...], wr_ref[...]

    # attr projection + bias once per batch tile: (TB, P)
    attr_proj = (jnp.dot(attr_mm, wa, preferred_element_type=jnp.float32)
                 + b_ref[...])

    # repr projection as one big matmul filling the MXU M dimension:
    # (TB*S, D) @ (D, P) -> (TB*S, P)
    repr_proj = jnp.dot(x_mm.reshape(tb * s, d), wr,
                        preferred_element_type=jnp.float32)
    pre = repr_proj.reshape(tb, s, p) + attr_proj[:, None, :]     # (TB, S, P)

    # attention score = <tanh(pre), weight_vector> ; done on the VPU/XLU
    # (multiply + lane reduction) instead of an N=1 MXU matmul.
    # weight_vector.bias is omitted: softmax is shift-invariant.
    score = jnp.sum(jnp.tanh(pre) * wv_ref[...], axis=-1)         # (TB, S)

    # TODO(synk): optional `mask` argument (masked_fill with -1e9) not wired
    # in; the module default (mask=None) is what is implemented here.

    # softmax over the sequence axis (torch dim=1), in f32.
    m = jnp.max(score, axis=-1, keepdims=True)                    # (TB, 1)
    e = jnp.exp(score - m)                                        # (TB, S)
    w = e * pl.reciprocal(jnp.sum(e, axis=-1, keepdims=True), approx=True)

    # weighted sum over S: (TB, D), sublane-dense store.
    o_ref[...] = jnp.sum(x * w[:, :, None], axis=1).astype(o_ref.dtype)


def _pick_block_b(B, S, D, itemsize):
    """Batch-tile size: multiple of 8 (or the full batch), sized so the
    double-buffered (TB, S, D) block stays far below v7x's 64 MiB VMEM."""
    if B % 8 != 0 or B <= 8:
        return B                      # full-batch block (block dims == array dims)
    budget = 8 * 1024 * 1024          # bytes for the double-buffered repr tile
    tb = 8
    while (tb * 2 <= min(B, 128)
           and B % (tb * 2) == 0
           and 2 * (tb * 2) * S * D * itemsize <= budget):
        tb *= 2
    return tb


def uop_concat_attention(attr, input_repr, weight_attr, weight_repr, bias,
                         wv_weight, wv_bias, *, block_b=None,
                         matmul_dtype=None):
    """attr: (B, A) f32; input_repr: (B, S, D) f32. Returns (B, D) f32."""
    B, A = attr.shape
    _, S, D = input_repr.shape
    P = weight_attr.shape[1]

    bias2d = bias.reshape(1, P)
    wv_row = wv_weight.reshape(1, P)
    # wv_bias is intentionally not passed to the kernel: adding a constant to
    # every score before the softmax does not change the output.
    del wv_bias

    tb = _pick_block_b(B, S, D, input_repr.dtype.itemsize) if block_b is None \
        else block_b
    assert B % tb == 0, f"block_b={tb} must divide B={B}"
    assert tb == B or tb % 8 == 0, "batch tile must be a multiple of 8 or full B"

    kernel = functools.partial(_uop_concat_attention_kernel,
                               matmul_dtype=matmul_dtype)

    return pl.pallas_call(
        kernel,
        out_shape=jax.ShapeDtypeStruct((B, D), input_repr.dtype),
        grid_spec=pltpu.PrefetchScalarGridSpec(
            num_scalar_prefetch=0,
            grid=(B // tb,),
            in_specs=[
                pl.BlockSpec((tb, A), lambda b: (b, 0)),          # attr
                pl.BlockSpec((tb, S, D), lambda b: (b, 0, 0)),    # input_repr
                pl.BlockSpec((A, P), lambda b: (0, 0)),           # weight_attr
                pl.BlockSpec((D, P), lambda b: (0, 0)),           # weight_repr
                pl.BlockSpec((1, P), lambda b: (0, 0)),           # bias
                pl.BlockSpec((1, P), lambda b: (0, 0)),           # weight_vector.weight
            ],
            out_specs=pl.BlockSpec((tb, D), lambda b: (b, 0)),
        ),
        compiler_params=pltpu.CompilerParams(
            dimension_semantics=("parallel",),       # shards across v7x's 2 TCs
            vmem_limit_bytes=48 * 1024 * 1024),
    )(attr, input_repr, weight_attr, weight_repr, bias2d, wv_row)


def _reference(attr, input_repr, weight_attr, weight_repr, bias,
               wv_weight, wv_bias):
    out_attr = (attr @ weight_attr)[:, None, :]                   # (B, 1, P)
    out_repr = input_repr @ weight_repr                           # (B, S, P)
    out = out_repr + out_attr + bias                              # (B, S, P)
    score = jnp.tanh(out) @ wv_weight.reshape(-1, 1) + wv_bias    # (B, S, 1)
    score = jax.nn.softmax(score[..., 0], axis=1)                 # (B, S)
    return jnp.sum(input_repr * score[..., None], axis=1)         # (B, D)


if __name__ == "__main__":
    def run_case(key, B, S, A, D, P, block_b=None, matmul_dtype=None,
                 tol=1e-3):
        ks = jax.random.split(key, 7)
        # Deterministic init mirroring reset_parameters() bounds (1/sqrt(fan_in)).
        bnd = 1.0 / math.sqrt(P)
        weight_attr = jax.random.uniform(ks[0], (A, P), jnp.float32, -bnd, bnd)
        weight_repr = jax.random.uniform(ks[1], (D, P), jnp.float32, -bnd, bnd)
        bias = jax.random.uniform(ks[2], (P,), jnp.float32, -bnd, bnd)
        wv_weight = jax.random.uniform(ks[3], (1, P), jnp.float32, -bnd, bnd)
        wv_bias = jax.random.uniform(ks[4], (1,), jnp.float32, -bnd, bnd)
        attr = jax.random.normal(ks[5], (B, A), jnp.float32)
        input_repr = jax.random.normal(ks[6], (B, S, D), jnp.float32)

        out = uop_concat_attention(attr, input_repr, weight_attr, weight_repr,
                                   bias, wv_weight, wv_bias,
                                   block_b=block_b, matmul_dtype=matmul_dtype)
        out = jax.block_until_ready(out)
        ref = _reference(attr, input_repr, weight_attr, weight_repr, bias,
                         wv_weight, wv_bias)
        assert out.shape == (B, D)
        err = float(jnp.max(jnp.abs(out - ref)))
        assert jnp.allclose(out, ref, atol=tol, rtol=tol), \
            f"mismatch vs JAX reference (max abs err {err})"

    key = jax.random.PRNGKey(0)
    k1, k2, k3 = jax.random.split(key, 3)

    # Small shapes consistent with the module (batch=2, seq=8, dims 16/32/32).
    run_case(k1, B=2, S=8, A=16, D=32, P=32)
    # Larger, MXU-friendly shapes exercising the tiled grid (4 steps of 8 rows).
    run_case(k2, B=32, S=64, A=16, D=128, P=128, block_b=8)
    # Same shapes with the automatically picked batch tile (single grid step).
    run_case(k3, B=32, S=64, A=16, D=128, P=128)

    print("KERNEL_OK")
</pallas_src>

<mosaic_0001>
module attributes {stable_mosaic.version = 11 : i64} {
  func.func @_uop_concat_attention_kernel(%arg0: i32, %arg1: memref<2x16xf32, #tpu.memory_space<vmem>>, %arg2: memref<2x8x32xf32, #tpu.memory_space<vmem>>, %arg3: memref<16x32xf32, #tpu.memory_space<vmem>>, %arg4: memref<32x32xf32, #tpu.memory_space<vmem>>, %arg5: memref<1x32xf32, #tpu.memory_space<vmem>>, %arg6: memref<1x32xf32, #tpu.memory_space<vmem>>, %arg7: memref<2x32xf32, #tpu.memory_space<vmem>>) attributes {dimension_semantics = [#tpu.dimension_semantics<parallel>], iteration_bounds = array<i64: 1>, scalar_prefetch = 0 : i64, scratch_operands = 0 : i64, tpu.core_type = #tpu.core_type<tc>, window_params = [{transform_indices = @transform_0, window_bounds = array<i64: 2, 16>}, {transform_indices = @transform_1, window_bounds = array<i64: 2, 8, 32>}, {pipeline_mode = #tpu.pipeline_mode<synchronous>, transform_indices = @transform_2, window_bounds = array<i64: 16, 32>}, {pipeline_mode = #tpu.pipeline_mode<synchronous>, transform_indices = @transform_3, window_bounds = array<i64: 32, 32>}, {pipeline_mode = #tpu.pipeline_mode<synchronous>, transform_indices = @transform_4, window_bounds = array<i64: 1, 32>}, {pipeline_mode = #tpu.pipeline_mode<synchronous>, transform_indices = @transform_5, window_bounds = array<i64: 1, 32>}, {transform_indices = @transform_6, window_bounds = array<i64: 2, 32>}]} {
    %c0 = arith.constant 0 : index
    %c0_0 = arith.constant 0 : index
    %c0_1 = arith.constant 0 : index
    %0 = vector.load %arg2[%c0, %c0_0, %c0_1] : memref<2x8x32xf32, #tpu.memory_space<vmem>>, vector<2x8x32xf32>
    %c0_2 = arith.constant 0 : index
    %c0_3 = arith.constant 0 : index
    %1 = vector.load %arg1[%c0_2, %c0_3] : memref<2x16xf32, #tpu.memory_space<vmem>>, vector<2x16xf32>
    %c0_4 = arith.constant 0 : index
    %c0_5 = arith.constant 0 : index
    %2 = vector.load %arg3[%c0_4, %c0_5] : memref<16x32xf32, #tpu.memory_space<vmem>>, vector<16x32xf32>
    %c0_6 = arith.constant 0 : index
    %c0_7 = arith.constant 0 : index
    %3 = vector.load %arg4[%c0_6, %c0_7] : memref<32x32xf32, #tpu.memory_space<vmem>>, vector<32x32xf32>
    %cst = arith.constant dense<0.000000e+00> : vector<2x32xf32>
    %4 = tpu.matmul %1, %2, %cst {dimension_numbers = #tpu.dot_dimension_numbers<[1], [0], [0], [1], [0, 0, 1, 1], [], []>} : vector<2x16xf32>, vector<16x32xf32>, vector<2x32xf32> -> vector<2x32xf32>
    %c0_8 = arith.constant 0 : index
    %c0_9 = arith.constant 0 : index
    %5 = vector.load %arg5[%c0_8, %c0_9] : memref<1x32xf32, #tpu.memory_space<vmem>>, vector<1x32xf32>
    %6 = vector.broadcast %5 : vector<1x32xf32> to vector<2x32xf32>
    %7 = arith.addf %4, %6 : vector<2x32xf32>
    %8 = vector.shape_cast %0 : vector<2x8x32xf32> to vector<16x32xf32>
    %cst_10 = arith.constant dense<0.000000e+00> : vector<16x32xf32>
    %9 = tpu.matmul %8, %3, %cst_10 {dimension_numbers = #tpu.dot_dimension_numbers<[1], [0], [0], [1], [0, 0, 1, 1], [], []>} : vector<16x32xf32>, vector<32x32xf32>, vector<16x32xf32> -> vector<16x32xf32>
    %10 = vector.shape_cast %9 : vector<16x32xf32> to vector<2x8x32xf32>
    %11 = vector.shape_cast %7 : vector<2x32xf32> to vector<2x1x32xf32>
    %12 = vector.broadcast %11 : vector<2x1x32xf32> to vector<2x8x32xf32>
    %13 = arith.addf %10, %12 : vector<2x8x32xf32>
    %14 = math.tanh %13 : vector<2x8x32xf32>
    %c0_11 = arith.constant 0 : index
    %c0_12 = arith.constant 0 : index
    %15 = vector.load %arg6[%c0_11, %c0_12] : memref<1x32xf32, #tpu.memory_space<vmem>>, vector<1x32xf32>
    %16 = vector.shape_cast %15 : vector<1x32xf32> to vector<1x1x32xf32>
    %17 = vector.broadcast %16 : vector<1x1x32xf32> to vector<2x8x32xf32>
    %18 = arith.mulf %14, %17 : vector<2x8x32xf32>
    %cst_13 = arith.constant dense<0.000000e+00> : vector<2x8xf32>
    %19 = vector.multi_reduction <add>, %18, %cst_13 [2] : vector<2x8x32xf32> to vector<2x8xf32>
    %cst_14 = arith.constant dense<0xFF800000> : vector<2xf32>
    %20 = vector.multi_reduction <maximumf>, %19, %cst_14 [1] : vector<2x8xf32> to vector<2xf32>
    %21 = vector.shape_cast %20 : vector<2xf32> to vector<2x1xf32>
    %22 = vector.broadcast %21 : vector<2x1xf32> to vector<2x8xf32>
    %23 = arith.subf %19, %22 : vector<2x8xf32>
    %24 = math.exp %23 : vector<2x8xf32>
    %cst_15 = arith.constant dense<0.000000e+00> : vector<2xf32>
    %25 = vector.multi_reduction <add>, %24, %cst_15 [1] : vector<2x8xf32> to vector<2xf32>
    %26 = vector.shape_cast %25 : vector<2xf32> to vector<2x1xf32>
    %27 = tpu.reciprocal %26 {approx = true} : vector<2x1xf32> -> vector<2x1xf32>
    %28 = vector.broadcast %27 : vector<2x1xf32> to vector<2x8xf32>
    %29 = arith.mulf %24, %28 : vector<2x8xf32>
    %30 = vector.shape_cast %29 : vector<2x8xf32> to vector<2x8x1xf32>
    %31 = vector.broadcast %30 : vector<2x8x1xf32> to vector<2x8x32xf32>
    %32 = arith.mulf %0, %31 : vector<2x8x32xf32>
    %cst_16 = arith.constant dense<0.000000e+00> : vector<2x32xf32>
    %33 = vector.multi_reduction <add>, %32, %cst_16 [1] : vector<2x8x32xf32> to vector<2x32xf32>
    %c0_17 = arith.constant 0 : index
    %c0_18 = arith.constant 0 : index
    %34 = vector.load %arg7[%c0_17, %c0_18] : memref<2x32xf32, #tpu.memory_space<vmem>>, vector<2x32xf32>
    tpu.vector_store %arg7[%c0_17, %c0_18], %33 {strides = array<i32>} : memref<2x32xf32, #tpu.memory_space<vmem>>, vector<2x32xf32>,
    return
  }
  func.func @transform_0(%arg0: i32) -> (i32, i32) {
    %c0_i32 = arith.constant 0 : i32
    %c0_i32_0 = arith.constant 0 : i32
    return %arg0, %c0_i32 : i32, i32
  }
  func.func @transform_1(%arg0: i32) -> (i32, i32, i32) {
    %c0_i32 = arith.constant 0 : i32
    %c0_i32_0 = arith.constant 0 : i32
    %c0_i32_1 = arith.constant 0 : i32
    return %arg0, %c0_i32, %c0_i32_0 : i32, i32, i32
  }
  func.func @transform_2(%arg0: i32) -> (i32, i32) {
    %c0_i32 = arith.constant 0 : i32
    %c0_i32_0 = arith.constant 0 : i32
    %c0_i32_1 = arith.constant 0 : i32
    return %c0_i32, %c0_i32_0 : i32, i32
  }
  func.func @transform_3(%arg0: i32) -> (i32, i32) {
    %c0_i32 = arith.constant 0 : i32
    %c0_i32_0 = arith.constant 0 : i32
    %c0_i32_1 = arith.constant 0 : i32
    return %c0_i32, %c0_i32_0 : i32, i32
  }
  func.func @transform_4(%arg0: i32) -> (i32, i32) {
    %c0_i32 = arith.constant 0 : i32
    %c0_i32_0 = arith.constant 0 : i32
    %c0_i32_1 = arith.constant 0 : i32
    return %c0_i32, %c0_i32_0 : i32, i32
  }
  func.func @transform_5(%arg0: i32) -> (i32, i32) {
    %c0_i32 = arith.constant 0 : i32
    %c0_i32_0 = arith.constant 0 : i32
    %c0_i32_1 = arith.constant 0 : i32
    return %c0_i32, %c0_i32_0 : i32, i32
  }
  func.func @transform_6(%arg0: i32) -> (i32, i32) {
    %c0_i32 = arith.constant 0 : i32
    %c0_i32_0 = arith.constant 0 : i32
    return %arg0, %c0_i32 : i32, i32
  }
}

</mosaic_0001>

<llo_original>
// kernel: tpu_custom_call.1
$region0: #{tpu_custom_call.1}
  #allocation0 [shape = 'u32[]', space=smem, size = 0x4, offset = 0x4, fixed_abs, tag = 'smem constant byte address 0x4 - core index']
  #allocation1 [shape = 'u32[144,128]{1,0:T(1,128)}', space=vmem, size = 0x12000, scoped, tag = 'internal scratch']
  %s0 = inlined_call_operand.hbm [shape: f32[2,16], index: 0, kind: input, shape index: {}]
  %s1 = inlined_call_operand.hbm [shape: f32[2,8,32], index: 1, kind: input, shape index: {}]
  %s2 = inlined_call_operand.hbm [shape: f32[16,32], index: 2, kind: input, shape index: {}]
  %s3 = inlined_call_operand.hbm [shape: f32[32,32], index: 3, kind: input, shape index: {}]
  %s4 = inlined_call_operand.vmem [shape: f32[1,32], index: 4, kind: input, shape index: {}]
  %s5 = inlined_call_operand.vmem [shape: f32[1,32], index: 5, kind: input, shape index: {}]
  %s6 = inlined_call_operand.hbm [shape: f32[2,32], index: 6, kind: output, shape index: {}]
  %s7 = sld [smem:[#allocation0]]
  $region50: #{tpu_custom_call.1} parent=0
    _
  %s9 = ssub.s32 1, %s7
  %s10 = scalar_select 0, %s9, %s7
  $region1: #{tpu_custom_call.1} parent=0
    #allocation2 [shape = 'u8[1024]{0}', space=vmem, size = 0x400, scoped, tag = 'input window, operand 0, single buffered']
    #allocation3 [shape = 's32[1]{0}', space=sflag, size = 0x4, scoped, tag = 'scoped memory for tpu_custom_call.1']
    #allocation4 [shape = 's32[1]{0}', space=sflag, size = 0x4, scoped, tag = 'scoped memory for tpu_custom_call.1']
    #allocation5 [shape = 'u8[8192]{0}', space=vmem, size = 0x2000, scoped, tag = 'input window, operand 1, single buffered']
    #allocation6 [shape = 's32[1]{0}', space=sflag, size = 0x4, scoped, tag = 'scoped memory for tpu_custom_call.1']
    #allocation7 [shape = 'u8[8192]{0}', space=vmem, size = 0x2000, scoped, tag = 'input window, operand 2, single buffered']
    #allocation8 [shape = 'u8[16384]{0}', space=vmem, size = 0x4000, scoped, tag = 'input window, operand 3, single buffered']
    #allocation9 [shape = 's32[1]{0}', space=sflag, size = 0x4, scoped, tag = 'scoped memory for tpu_custom_call.1']
    #allocation10 [shape = 'u8[1024]{0}', space=vmem, size = 0x400, scoped, tag = 'output window, operand 0, single buffered']
    %11 = vsyncpa [#allocation3], 0
    %12 = vsyncpa [#allocation6], 0
    %13 = vsyncpa [#allocation9], 0
    %14 = vsyncpa [#allocation4], 0
    // Predicated region
    $region2: #{tpu_custom_call.1} parent=1 // pred_check
      _
    $region3: #{tpu_custom_call.1} parent=1 // pred_check_branch
      %16 = sbr.rel (0) target = $region5
    $region4: #{tpu_custom_call.1} parent=1 // pred_region
      %s18 = ssub.s32 32, 32
      %19 = vsyncadd [#allocation3], %s18
      %s21 = sshll.u32 [#allocation2], 4
      %s22 = int_to_ptr.vmem [resolvable:$true] %s21
      %24 = dma.hbm_to_vmem [thread:$0]  %s0, 32, %s22, [#allocation3]
    $region5: #{tpu_custom_call.1} parent=1 // pred_fallthru
      _
    // Predicated region
    $region6: #{tpu_custom_call.1} parent=1 // pred_check
      _
    $region7: #{tpu_custom_call.1} parent=1 // pred_check_branch
      %26 = sbr.rel (0) target = $region9
    $region8: #{tpu_custom_call.1} parent=1 // pred_region
      %s28 = ssub.s32 256, 256
      %29 = vsyncadd [#allocation6], %s28
      %s30 = sshll.u32 [#allocation5], 4
      %s31 = int_to_ptr.vmem [resolvable:$true] %s30
      %36 = dma.hbm_to_vmem [thread:$0]  %s1, 256, %s31, [#allocation6], 128, 128, 8
    $region9: #{tpu_custom_call.1} parent=1 // pred_fallthru
      _
    // Predicated region
    $region10: #{tpu_custom_call.1} parent=1 // pred_check
      _
    $region11: #{tpu_custom_call.1} parent=1 // pred_check_branch
      %38 = sbr.rel (0) target = $region13
    $region12: #{tpu_custom_call.1} parent=1 // pred_region
      %s40 = ssub.s32 256, 256
      %41 = vsyncadd [#allocation6], %s40
      %s42 = sshll.u32 [#allocation7], 4
      %s43 = int_to_ptr.vmem [resolvable:$true] %s42
      %48 = dma.hbm_to_vmem [thread:$0]  %s2, 256, %s43, [#allocation6], 128, 128, 8
    $region13: #{tpu_custom_call.1} parent=1 // pred_fallthru
      _
    // Predicated region
    $region14: #{tpu_custom_call.1} parent=1 // pred_check
      _
    $region15: #{tpu_custom_call.1} parent=1 // pred_check_branch
      %50 = sbr.rel (0) target = $region17
    $region16: #{tpu_custom_call.1} parent=1 // pred_region
      %s52 = ssub.s32 512, 512
      %53 = vsyncadd [#allocation9], %s52
      %s54 = sshll.u32 [#allocation8], 4
      %s55 = int_to_ptr.vmem [resolvable:$true] %s54
      %60 = dma.hbm_to_vmem [thread:$0]  %s3, 512, %s55, [#allocation9], 128, 128, 8
    $region17: #{tpu_custom_call.1} parent=1 // pred_fallthru
      _
    // Predicated region
    $region18: #{tpu_custom_call.1} parent=1 // pred_check
      _
    $region19: #{tpu_custom_call.1} parent=1 // pred_check_branch
      %62 = sbr.rel (0) target = $region21
    $region20: #{tpu_custom_call.1} parent=1 // pred_region
      _
    $region21: #{tpu_custom_call.1} parent=1 // pred_fallthru
      _
    // Predicated region
    $region22: #{tpu_custom_call.1} parent=1 // pred_check
      _
    $region23: #{tpu_custom_call.1} parent=1 // pred_check_branch
      %64 = sbr.rel (0) target = $region25
    $region24: #{tpu_custom_call.1} parent=1 // pred_region
      _
    $region25: #{tpu_custom_call.1} parent=1 // pred_fallthru
      _
    // Predicated region
    $region26: #{tpu_custom_call.1} parent=1 // pred_check
      _
    $region27: #{tpu_custom_call.1} parent=1 // pred_check_branch
      %66 = sbr.rel (0) target = $region29
    $region28: #{tpu_custom_call.1} parent=1 // pred_region
      %67 = dma.done [#allocation3], 32
    $region29: #{tpu_custom_call.1} parent=1 // pred_fallthru
      _
    // Predicated region
    $region30: #{tpu_custom_call.1} parent=1 // pred_check
      _
    $region31: #{tpu_custom_call.1} parent=1 // pred_check_branch
      %69 = sbr.rel (0) target = $region33
    $region32: #{tpu_custom_call.1} parent=1 // pred_region
      %70 = dma.done [#allocation6], 256
    $region33: #{tpu_custom_call.1} parent=1 // pred_fallthru
      _
    // Predicated region
    $region34: #{tpu_custom_call.1} parent=1 // pred_check
      _
    $region35: #{tpu_custom_call.1} parent=1 // pred_check_branch
      %72 = sbr.rel (0) target = $region37
    $region36: #{tpu_custom_call.1} parent=1 // pred_region
      %73 = dma.done [#allocation6], 256
    $region37: #{tpu_custom_call.1} parent=1 // pred_fallthru
      _
    // Predicated region
    $region38: #{tpu_custom_call.1} parent=1 // pred_check
      _
    $region39: #{tpu_custom_call.1} parent=1 // pred_check_branch
      %75 = sbr.rel (0) target = $region41
    $region40: #{tpu_custom_call.1} parent=1 // pred_region
      %76 = dma.done [#allocation9], 512
    $region41: #{tpu_custom_call.1} parent=1 // pred_fallthru
      _
    %v77 = vld [vmem:[#allocation5] sm:$0xff]
    %v78 = vld [vmem:[#allocation5 + $0x8] sm:$0xff]
    %v79 = vld [vmem:[#allocation2] sm:$0x3]
    %v80 = vld [vmem:[#allocation7] sm:$0xff]
    %v81 = vld [vmem:[#allocation7 + $0x8] sm:$0xff]
    %v82 = vld [vmem:[#allocation8] sm:$0xff]
    %v83 = vld [vmem:[#allocation8 + $0x8] sm:$0xff]
    %v84 = vld [vmem:[#allocation8 + $0x10] sm:$0xff]
    %v85 = vld [vmem:[#allocation8 + $0x18] sm:$0xff]
    %v86 = vld [vmem:[%s4] sm:$0x1]
    %v88 = vlaneseq
    %v89 = vshrl.u32 %v88, 7
    %v90 = vsub.s32 0, %v89
    %v91 = vrot.slane %v86, %v90
    %vm93 = vcmask 130048
    %v95 = vsel %vm93, %v79, 0
    %97 = vmatprep.subr.mxu0 0.0
    %98 = vmatpush1.msra.mxu0 %v80
    %99 = vmatprep.subr.mxu0 0.0
    %100 = vmatpush1.msra.mxu0 %v81
    %101 = vmatprep.subr.mxu0 0.0
    %102 = vmatpush1.msra.mxu0 0.0
    %103 = vmatprep.subr.mxu0 0.0
    %104 = vmatpush1.msra.mxu0 0.0
    %105 = vmatprep.subr.mxu0 0.0
    %106 = vmatpush1.msra.mxu0 0.0
    %107 = vmatprep.subr.mxu0 0.0
    %108 = vmatpush1.msra.mxu0 0.0
    %109 = vmatprep.subr.mxu0 0.0
    %110 = vmatpush1.msra.mxu0 0.0
    %111 = vmatprep.subr.mxu0 0.0
    %112 = vmatpush1.msra.mxu0 0.0
    %113 = vmatprep.subr.mxu0 0.0
    %114 = vmatpush1.msra.mxu0 0.0
    %115 = vmatprep.subr.mxu0 0.0
    %116 = vmatpush1.msra.mxu0 0.0
    %117 = vmatprep.subr.mxu0 0.0
    %118 = vmatpush1.msra.mxu0 0.0
    %119 = vmatprep.subr.mxu0 0.0
    %120 = vmatpush1.msra.mxu0 0.0
    %121 = vmatprep.subr.mxu0 0.0
    %122 = vmatpush1.msra.mxu0 0.0
    %123 = vmatprep.subr.mxu0 0.0
    %124 = vmatpush1.msra.mxu0 0.0
    %125 = vmatprep.subr.mxu0 0.0
    %126 = vmatpush1.msra.mxu0 0.0
    %127 = vmatprep.subr.mxu0 0.0
    %128 = vmatpush1.msra.mxu0 0.0
    %129 = vmatprep.subr.mxu0 0.0
    %130 = vmatpush1.msra.mxu0 0.0
    %131 = vmatprep.subr.mxu0 0.0
    %132 = vmatpush1.msra.mxu0 0.0
    %133 = vmatprep.subr.mxu0 0.0
    %134 = vmatpush1.msra.mxu0 0.0
    %135 = vmatprep.subr.mxu0 0.0
    %136 = vmatpush1.msra.mxu0 0.0
    %137 = vmatprep.subr.mxu0 0.0
    %138 = vmatpush1.msra.mxu0 0.0
    %139 = vmatprep.subr.mxu0 0.0
    %140 = vmatpush1.msra.mxu0 0.0
    %141 = vmatprep.subr.mxu0 0.0
    %142 = vmatpush1.msra.mxu0 0.0
    %143 = vmatprep.subr.mxu0 0.0
    %144 = vmatpush1.msra.mxu0 0.0
    %145 = vmatprep.subr.mxu0 0.0
    %146 = vmatpush1.msra.mxu0 0.0
    %147 = vmatprep.subr.mxu0 0.0
    %148 = vmatpush1.msra.mxu0 0.0
    %149 = vmatprep.subr.mxu0 0.0
    %150 = vmatpush1.msra.mxu0 0.0
    %151 = vmatprep.subr.mxu0 0.0
    %152 = vmatpush1.msra.mxu0 0.0
    %153 = vmatprep.subr.mxu0 0.0
    %154 = vmatpush1.msra.mxu0 0.0
    %155 = vmatprep.subr.mxu0 0.0
    %156 = vmatpush1.msra.mxu0 0.0
    %157 = vmatprep.subr.mxu0 0.0
    %158 = vmatpush1.msra.mxu0 0.0
    %159 = vmatprep.subr.mxu0 0.0
    %160 = vmatpush1.msra.mxu0 0.0
    %161 = vmatprep.mubr.f32.mxu0 0.0
    %162 = vmatmul.mubr.f32.gmra.mrb[0].mxu0 %v95
    %v163 = vpop.f32.mrb[0].mxu0
    %v164 = vadd.f32 %v91, %v163
    %v165 = vpop.f32.mrb[0].mxu0
    %166 = vdwg.mxu0
    %vm167 = vcmask 261120
    %v169 = vsel %vm167, %v77, 0
    %v172 = vsel %vm167, %v78, 0
    %174 = vmatprep.subr.mxu0 0.0
    %175 = vmatpush1.msra.mxu0 %v82
    %176 = vmatprep.subr.mxu0 0.0
    %177 = vmatpush1.msra.mxu0 %v83
    %178 = vmatprep.subr.mxu0 0.0
    %179 = vmatpush1.msra.mxu0 %v84
    %180 = vmatprep.subr.mxu0 0.0
    %181 = vmatpush1.msra.mxu0 %v85
    %182 = vmatprep.subr.mxu0 0.0
    %183 = vmatpush1.msra.mxu0 0.0
    %184 = vmatprep.subr.mxu0 0.0
    %185 = vmatpush1.msra.mxu0 0.0
    %186 = vmatprep.subr.mxu0 0.0
    %187 = vmatpush1.msra.mxu0 0.0
    %188 = vmatprep.subr.mxu0 0.0
    %189 = vmatpush1.msra.mxu0 0.0
    %190 = vmatprep.subr.mxu0 0.0
    %191 = vmatpush1.msra.mxu0 0.0
    %192 = vmatprep.subr.mxu0 0.0
    %193 = vmatpush1.msra.mxu0 0.0
    %194 = vmatprep.subr.mxu0 0.0
    %195 = vmatpush1.msra.mxu0 0.0
    %196 = vmatprep.subr.mxu0 0.0
    %197 = vmatpush1.msra.mxu0 0.0
    %198 = vmatprep.subr.mxu0 0.0
    %199 = vmatpush1.msra.mxu0 0.0
    %200 = vmatprep.subr.mxu0 0.0
    %201 = vmatpush1.msra.mxu0 0.0
    %202 = vmatprep.subr.mxu0 0.0
    %203 = vmatpush1.msra.mxu0 0.0
    %204 = vmatprep.subr.mxu0 0.0
    %205 = vmatpush1.msra.mxu0 0.0
    %206 = vmatprep.subr.mxu0 0.0
    %207 = vmatpush1.msra.mxu0 0.0
    %208 = vmatprep.subr.mxu0 0.0
    %209 = vmatpush1.msra.mxu0 0.0
    %210 = vmatprep.subr.mxu0 0.0
    %211 = vmatpush1.msra.mxu0 0.0
    %212 = vmatprep.subr.mxu0 0.0
    %213 = vmatpush1.msra.mxu0 0.0
    %214 = vmatprep.subr.mxu0 0.0
    %215 = vmatpush1.msra.mxu0 0.0
    %216 = vmatprep.subr.mxu0 0.0
    %217 = vmatpush1.msra.mxu0 0.0
    %218 = vmatprep.subr.mxu0 0.0
    %219 = vmatpush1.msra.mxu0 0.0
    %220 = vmatprep.subr.mxu0 0.0
    %221 = vmatpush1.msra.mxu0 0.0
    %222 = vmatprep.subr.mxu0 0.0
    %223 = vmatpush1.msra.mxu0 0.0
    %224 = vmatprep.subr.mxu0 0.0
    %225 = vmatpush1.msra.mxu0 0.0
    %226 = vmatprep.subr.mxu0 0.0
    %227 = vmatpush1.msra.mxu0 0.0
    %228 = vmatprep.subr.mxu0 0.0
    %229 = vmatpush1.msra.mxu0 0.0
    %230 = vmatprep.subr.mxu0 0.0
    %231 = vmatpush1.msra.mxu0 0.0
    %232 = vmatprep.subr.mxu0 0.0
    %233 = vmatpush1.msra.mxu0 0.0
    %234 = vmatprep.subr.mxu0 0.0
    %235 = vmatpush1.msra.mxu0 0.0
    %236 = vmatprep.subr.mxu0 0.0
    %237 = vmatpush1.msra.mxu0 0.0
    %238 = vmatprep.mubr.f32.mxu0 0.0
    %239 = vmatmul.mubr.f32.gmra.mrb[0].mxu0 %v169
    %v240 = vpop.f32.mrb[0].mxu0
    %v241 = vadd.f32 0.0, %v240
    %v242 = vpop.f32.mrb[0].mxu0
    %243 = vmatprep.mubr.f32.mxu0 0.0
    %244 = vmatmul.mubr.f32.gmra.mrb[0].mxu0 %v172
    %v245 = vpop.f32.mrb[0].mxu0
    %v246 = vadd.f32 0.0, %v245
    %v247 = vpop.f32.mrb[0].mxu0
    %248 = vdwg.mxu0
    %v251 = vunpack.c.l.s4 1966171168
    %v252 = vunpack.c.0.s8 %v251
    %v253 = vlaneseq
    %v254 = vshrl.u32 %v253, 7
    %v255 = vsub.s32 %v252, %v254
    %v256 = vrot.slane %v164, %v255
    %v257 = vcombine.high %v256, %v256
    %v259 = vunpack.c.l.s4 1966171168
    %v260 = vunpack.c.0.s8 %v259
    %v261 = vlaneseq
    %v262 = vshrl.u32 %v261, 7
    %v263 = vsub.s32 %v260, %v262
    %v264 = vrot.slane %v256, %v263
    %v266 = vunpack.c.l.s4 1966171168
    %v267 = vunpack.c.0.s8 %v266
    %v268 = vlaneseq
    %v269 = vshrl.u32 %v268, 7
    %v270 = vsub.s32 %v267, %v269
    %v271 = vrot.slane %v257, %v270
    %v272 = vlaneseq
    %v273 = vshrl.u32 %v272, 7
    %v274 = vsub.s32 0, %v273
    %v275 = vrot.slane %v264, %v274
    %v276 = vlaneseq
    %v277 = vshrl.u32 %v276, 7
    %v278 = vsub.s32 0, %v277
    %v279 = vrot.slane %v271, %v278
    %v282 = vadd.f32 %v241, %v275
    %v283 = vadd.f32 %v246, %v279
    %v284 = vtanh.pop %v282
    %v285 = vtanh.pop %v283
    %v286 = vld [vmem:[%s5] sm:$0x1]
    %v288 = vlaneseq
    %v289 = vshrl.u32 %v288, 7
    %v290 = vsub.s32 0, %v289
    %v291 = vrot.slane %v286, %v290
    %v293 = vmul.f32 %v284, %v291
    %v294 = vmul.f32 %v285, %v291
    %v295 = vsel %vm167, %v293, 0.0
    %296 = vadd.xlane.f32.xlu0 %v295
    %v297 = vpop.xlane.xlu0 %296
    %v298 = vsel %vm167, %v294, 0.0
    %299 = vadd.xlane.f32.xlu0 %v298
    %v300 = vpop.xlane.xlu0 %299
    %v303 = vlaneseq
    %v304 = vand.u32 %v303, 127
    %v305 = vlaneseq
    %v306 = vshrl.u32 %v305, 7
    %v307 = vsub.s32 %v304, %v306
    %v308 = vrot.slane %v297, %v307
    %v309 = vlaneseq
    %v310 = vshrl.u32 %v309, 7
    %v311 = vsub.s32 %v304, %v310
    %v312 = vrot.slane %v300, %v311
    %vm313 = vcmask 1041409
    %v314 = vsel %vm313, %v312, %v308
    %vm316 = vcmask 58368
    %v317 = vsel %vm316, %v314, -inf
    %318 = vmax.xlane.f32.xlu0 %v317
    %v319 = vpop.xlane.xlu0 %318
    %v321 = vlaneseq
    %v322 = vshrl.u32 %v321, 7
    %v323 = vsub.s32 0, %v322
    %v324 = vrot.slane %v319, %v323
    %v325 = vlaneseq
    %v326 = vshrl.u32 %v325, 7
    %v327 = vsub.s32 1, %v326
    %v328 = vrot.slane %v319, %v327
    %v331 = vsub.f32 %v297, %v324
    %v332 = vsub.f32 %v300, %v328
    %v333 = vmul.f32 %v331, 1.442695
    %v334 = vpow.pop %v333
    %v335 = vmul.f32 %v332, 1.442695
    %v336 = vpow.pop %v335
    %339 = vset.pattern.permute.xlu0 0
    %340 = vperm.xlu0 %339, %v334
    %v341 = vpop.permute.xlu0 %340
    %342 = vset.pattern.permute.xlu0 0
    %343 = vperm.xlu0 %342, %v336
    %v344 = vpop.permute.xlu0 %343
    %v345 = vlaneseq
    %v346 = vshrl.u32 %v345, 7
    %v347 = vsub.s32 %v304, %v346
    %v348 = vrot.slane %v341, %v347
    %v349 = vlaneseq
    %v350 = vshrl.u32 %v349, 7
    %v351 = vsub.s32 %v304, %v350
    %v352 = vrot.slane %v344, %v351
    %v353 = vsel %vm313, %v352, %v348
    %v355 = vsel %vm316, %v353, 0.0
    %356 = vadd.xlane.f32.xlu0 %v355
    %v357 = vpop.xlane.xlu0 %356
    %v358 = vrcp.pop %v357
    %v360 = vlaneseq
    %v361 = vshrl.u32 %v360, 7
    %v362 = vsub.s32 0, %v361
    %v363 = vrot.slane %v358, %v362
    %v364 = vlaneseq
    %v365 = vshrl.u32 %v364, 7
    %v366 = vsub.s32 1, %v365
    %v367 = vrot.slane %v358, %v366
    %v370 = vmul.f32 %v334, %v363
    %v371 = vmul.f32 %v336, %v367
    %373 = vset.pattern.permute.xlu0 0
    %374 = vperm.xlu0 %373, %v370
    %v375 = vpop.permute.xlu0 %374
    %378 = vset.pattern.permute.xlu0 0
    %379 = vperm.xlu0 %378, %v371
    %v380 = vpop.permute.xlu0 %379
    %v382 = vmul.f32 %v77, %v375
    %v383 = vmul.f32 %v78, %v380
    %v384 = vsel %vm167, %v382, 0.0
    %v385 = vrot.slane %v384, 4
    %v386 = vadd.f32 %v384, %v385
    %v387 = vrot.slane %v386, 2
    %v388 = vadd.f32 %v386, %v387
    %v389 = vrot.slane %v388, 1
    %v390 = vadd.f32 %v388, %v389
    %v391 = vsel %vm167, %v383, 0.0
    %v392 = vrot.slane %v391, 4
    %v393 = vadd.f32 %v391, %v392
    %v394 = vrot.slane %v393, 2
    %v395 = vadd.f32 %v393, %v394
    %v396 = vrot.slane %v395, 1
    %v397 = vadd.f32 %v395, %v396
    %v400 = vsel %vm313, %v397, %v390
    %vm402 = vcmask 254976
    %403 = vst.msk [vmem:[#allocation10] sm:$0x3] %vm402, %v400
    // Predicated region
    $region42: #{tpu_custom_call.1} parent=1 // pred_check
      _
    $region43: #{tpu_custom_call.1} parent=1 // pred_check_branch
      %405 = sbr.rel (0) target = $region45
    $region44: #{tpu_custom_call.1} parent=1 // pred_region
      %s407 = ssub.s32 32, 32
      %408 = vsyncadd [#allocation4], %s407
      %s410 = sshll.u32 [#allocation10], 4
      %s411 = int_to_ptr.vmem [resolvable:$true] %s410
      %413 = dma.vmem_to_hbm [thread:$0]  %s411, 32, %s6, [#allocation4]
    $region45: #{tpu_custom_call.1} parent=1 // pred_fallthru
      _
    // Predicated region
    $region46: #{tpu_custom_call.1} parent=1 // pred_check
      _
    $region47: #{tpu_custom_call.1} parent=1 // pred_check_branch
      %415 = sbr.rel (0) target = $region49
    $region48: #{tpu_custom_call.1} parent=1 // pred_region
      %416 = dma.done [#allocation4], 32
    $region49: #{tpu_custom_call.1} parent=1 // pred_fallthru
      _
    %417 = vsyncpa [#allocation3], 1
    %418 = vsyncpa [#allocation6], 1
    %419 = vsyncpa [#allocation9], 1
    %420 = vsyncpa [#allocation4], 1

</llo_original>
